<compile_context>
chip_gen: v7x
topology: tpu7x:2x2x1
jax: 0.10.0
libtpu: 0.0.40
codegen_flags: <defaults>
</compile_context>

<pallas_src>
import jax
import jax.numpy as jnp
import numpy as np
from jax.experimental import pallas as pl
from jax.experimental.pallas import tpu as pltpu

KERNEL_SIZE = 12     # fixed by the hardcoded padding=6 in moving_avg
PAD = 6


def _moving_mean_kernel(x_ref, mean_ref, pad_ref):
    # x_ref:   (bt, L, ct) block (bt == 1 on the folded small-C path)
    # pad_ref: (bt, L + 11, ct) f32 VMEM scratch:
    #          rows [0:5) zeros | rows [5:5+L) = x | rows [5+L:) zeros
    bt, lp, ct = pad_ref.shape
    L = lp - (KERNEL_SIZE - 1)

    # Re-zero the 11 halo rows every step (cheap; keeps the kernel correct for
    # any grid-step order / megacore split) and drop x straight into the middle
    # of the scratch (single upcast for sub-f32 inputs).
    pad_ref[:, 0:PAD - 1, :] = jnp.zeros((bt, PAD - 1, ct), jnp.float32)
    pad_ref[:, PAD - 1 + L:, :] = jnp.zeros((bt, PAD, ct), jnp.float32)
    pad_ref[:, PAD - 1:PAD - 1 + L, :] = x_ref[...].astype(jnp.float32)

    # AvgPool1d(k=12, stride=1, pad=6, count_include_pad=True) followed by
    # dropping output index 0:  out[t] = (1/12) * sum_{d=0..11} x[t - 5 + d],
    # out-of-range terms contributing zero.  With p[5 + i] = x[i] this is
    # sum_d p[t + d]: 12 static sublane-shifted slices of the scratch.
    acc = pad_ref[:, 0:L, :]
    for d in range(1, KERNEL_SIZE):            # static unrolled add chain
        acc = acc + pad_ref[:, d:d + L, :]
    mean_ref[...] = (acc * (1.0 / KERNEL_SIZE)).astype(mean_ref.dtype)


def _budget():
    """(per-block byte target, vmem_limit_bytes), per TPU generation."""
    try:
        cap = getattr(pltpu.get_tpu_info(), "vmem_capacity_bytes", None)
    except Exception:
        cap = None
    if cap is not None and cap >= 100 * 1024 * 1024:     # v5e / v6e: 128 MiB VMEM
        return 4 * 1024 * 1024, 64 * 1024 * 1024
    return 2 * 1024 * 1024, 32 * 1024 * 1024             # v7x (64 MiB) / unknown


def _pick_lane_block(n_lanes, seq_len, target_bytes):
    """Lane-tile width for the folded (L, B*C) slab (sized against f32)."""
    if n_lanes <= 128:
        # Single lane-tile; grid collapses to one step (acceptable: tiny shape).
        return n_lanes
    ct = (target_bytes // max(1, seq_len * 4)) // 128 * 128
    ct = min(ct, max(128, (n_lanes // 2) // 128 * 128))   # keep >= 2 grid steps
    return max(128, ct)


def _pick_channel_block(C, lane_target=512):
    """Lane-tile width for the direct (B, L, C) path (C >= 128)."""
    if C % 128 == 0:
        return min(C, lane_target)
    if C <= lane_target:
        return C                     # full last dim: always a legal block shape
    return lane_target               # multiple of 128; last block is masked


def _pick_batch_block(B, L, ct, target_bytes):
    bt = max(1, target_bytes // max(1, L * ct * 4))
    if B >= 2:
        bt = min(bt, (B + 1) // 2)   # >= 2 grid steps over batch (v7x megacore)
    return min(bt, B)


@jax.jit
def series_decomp(x):
    """x: (B, L, C) -> (moving_mean, residual), both (B, L, C), dtype of x."""
    B, L, C = x.shape
    target_bytes, vmem_limit = _budget()

    if C >= 128:
        # Direct path: no fold, no wrapper transposes.  Lane dim is C (dense),
        # the 12 window shifts run along the sublane (L) axis.
        ct = _pick_channel_block(C)
        bt = _pick_batch_block(B, L, ct, target_bytes)
        spec = pl.BlockSpec((bt, L, ct), lambda i, j: (i, 0, j))
        mean = pl.pallas_call(
            _moving_mean_kernel,
            out_shape=jax.ShapeDtypeStruct((B, L, C), x.dtype),
            grid=(pl.cdiv(B, bt), pl.cdiv(C, ct)),
            in_specs=[spec],
            out_specs=spec,
            scratch_shapes=[
                pltpu.VMEM((bt, L + KERNEL_SIZE - 1, ct), jnp.float32)],
            compiler_params=pltpu.CompilerParams(
                dimension_semantics=("parallel", "parallel"),
                vmem_limit_bytes=vmem_limit),
        )(x)
    else:
        # Narrow-channel path: fold (batch, channel) into one lane-dense axis,
        # time-major (L, B*C) slab, so stores are unmasked 128-lane writes.
        R = B * C
        xs = jnp.transpose(x, (1, 0, 2)).reshape(1, L, R)
        ct = _pick_lane_block(R, L, target_bytes)
        spec = pl.BlockSpec((1, L, ct), lambda j: (0, 0, j))
        mean_s = pl.pallas_call(
            _moving_mean_kernel,
            out_shape=jax.ShapeDtypeStruct((1, L, R), x.dtype),
            grid=(pl.cdiv(R, ct),),
            in_specs=[spec],
            out_specs=spec,
            scratch_shapes=[
                pltpu.VMEM((1, L + KERNEL_SIZE - 1, ct), jnp.float32)],
            compiler_params=pltpu.CompilerParams(
                dimension_semantics=("parallel",),
                vmem_limit_bytes=vmem_limit),
        )(xs)
        mean = jnp.transpose(mean_s.reshape(L, B, C), (1, 0, 2))

    residual = x - mean        # fused by XLA with the mean un-fold (narrow path)
    return mean, residual


def _reference(x_np):
    """Pure-numpy reference of the PyTorch forward (for validation)."""
    B, L, C = x_np.shape
    k, p = KERNEL_SIZE, PAD
    xp = np.zeros((B, L + 2 * p, C), np.float64)
    xp[:, p:p + L, :] = x_np
    L_out = L + 2 * p - k + 1
    pooled = np.zeros((B, L_out, C), np.float64)
    for j in range(L_out):
        pooled[:, j, :] = xp[:, j:j + k, :].sum(axis=1) / k
    mean = pooled[:, 1:, :]            # index_select(range(1, L_out))
    res = x_np - mean
    return mean, res


if __name__ == "__main__":
    key = jax.random.PRNGKey(0)
    # (B, L, C): narrow-C single tile, narrow-C ragged multi-tile,
    # wide-C direct path (C == 128), wide-C ragged lanes + ragged batch block.
    shapes = [(2, 16, 8), (5, 20, 32), (2, 16, 128), (3, 12, 160)]
    for i, (B, L, C) in enumerate(shapes):
        x = jax.random.normal(jax.random.fold_in(key, i), (B, L, C),
                              dtype=jnp.float32)
        mean, res = series_decomp(x)
        mean = jax.block_until_ready(mean)
        res = jax.block_until_ready(res)

        ref_mean, ref_res = _reference(np.asarray(x, dtype=np.float64))
        np.testing.assert_allclose(np.asarray(mean), ref_mean, rtol=1e-5, atol=1e-5)
        np.testing.assert_allclose(np.asarray(res), ref_res, rtol=1e-5, atol=1e-5)

    print("KERNEL_OK")
</pallas_src>

<mosaic_0001>
module attributes {stable_mosaic.version = 11 : i64} {
  func.func @_moving_mean_kernel(%arg0: i32, %arg1: memref<1x16x16xf32, #tpu.memory_space<vmem>>, %arg2: memref<1x16x16xf32, #tpu.memory_space<vmem>>, %arg3: memref<1x27x16xf32, #tpu.memory_space<vmem>>) attributes {dimension_semantics = [#tpu.dimension_semantics<parallel>], iteration_bounds = array<i64: 1>, scalar_prefetch = 0 : i64, scratch_operands = 1 : i64, tpu.core_type = #tpu.core_type<tc>, window_params = [{transform_indices = @transform_0, window_bounds = array<i64: 1, 16, 16>}, {transform_indices = @transform_1, window_bounds = array<i64: 1, 16, 16>}]} {
    %cst = arith.constant 0.000000e+00 : f32
    %0 = vector.broadcast %cst : f32 to vector<1x5x16xf32>
    %c0 = arith.constant 0 : index
    %c0_0 = arith.constant 0 : index
    %c0_1 = arith.constant 0 : index
    %1 = vector.load %arg3[%c0, %c0_0, %c0_1] : memref<1x27x16xf32, #tpu.memory_space<vmem>>, vector<1x5x16xf32>
    tpu.vector_store %arg3[%c0, %c0_0, %c0_1], %0 {strides = array<i32>} : memref<1x27x16xf32, #tpu.memory_space<vmem>>, vector<1x5x16xf32>,
    %cst_2 = arith.constant 0.000000e+00 : f32
    %2 = vector.broadcast %cst_2 : f32 to vector<1x6x16xf32>
    %c0_3 = arith.constant 0 : index
    %c21 = arith.constant 21 : index
    %c0_4 = arith.constant 0 : index
    %3 = vector.load %arg3[%c0_3, %c21, %c0_4] : memref<1x27x16xf32, #tpu.memory_space<vmem>>, vector<1x6x16xf32>
    tpu.vector_store %arg3[%c0_3, %c21, %c0_4], %2 {strides = array<i32>} : memref<1x27x16xf32, #tpu.memory_space<vmem>>, vector<1x6x16xf32>,
    %c0_5 = arith.constant 0 : index
    %c0_6 = arith.constant 0 : index
    %c0_7 = arith.constant 0 : index
    %4 = vector.load %arg1[%c0_5, %c0_6, %c0_7] : memref<1x16x16xf32, #tpu.memory_space<vmem>>, vector<1x16x16xf32>
    %c0_8 = arith.constant 0 : index
    %c5 = arith.constant 5 : index
    %c0_9 = arith.constant 0 : index
    %5 = vector.load %arg3[%c0_8, %c5, %c0_9] : memref<1x27x16xf32, #tpu.memory_space<vmem>>, vector<1x16x16xf32>
    tpu.vector_store %arg3[%c0_8, %c5, %c0_9], %4 {strides = array<i32>} : memref<1x27x16xf32, #tpu.memory_space<vmem>>, vector<1x16x16xf32>,
    %c0_10 = arith.constant 0 : index
    %c0_11 = arith.constant 0 : index
    %c0_12 = arith.constant 0 : index
    %6 = vector.load %arg3[%c0_10, %c0_11, %c0_12] : memref<1x27x16xf32, #tpu.memory_space<vmem>>, vector<1x16x16xf32>
    %c0_13 = arith.constant 0 : index
    %c1 = arith.constant 1 : index
    %c0_14 = arith.constant 0 : index
    %7 = vector.load %arg3[%c0_13, %c1, %c0_14] : memref<1x27x16xf32, #tpu.memory_space<vmem>>, vector<1x16x16xf32>
    %8 = arith.addf %6, %7 : vector<1x16x16xf32>
    %c0_15 = arith.constant 0 : index
    %c2 = arith.constant 2 : index
    %c0_16 = arith.constant 0 : index
    %9 = vector.load %arg3[%c0_15, %c2, %c0_16] : memref<1x27x16xf32, #tpu.memory_space<vmem>>, vector<1x16x16xf32>
    %10 = arith.addf %8, %9 : vector<1x16x16xf32>
    %c0_17 = arith.constant 0 : index
    %c3 = arith.constant 3 : index
    %c0_18 = arith.constant 0 : index
    %11 = vector.load %arg3[%c0_17, %c3, %c0_18] : memref<1x27x16xf32, #tpu.memory_space<vmem>>, vector<1x16x16xf32>
    %12 = arith.addf %10, %11 : vector<1x16x16xf32>
    %c0_19 = arith.constant 0 : index
    %c4 = arith.constant 4 : index
    %c0_20 = arith.constant 0 : index
    %13 = vector.load %arg3[%c0_19, %c4, %c0_20] : memref<1x27x16xf32, #tpu.memory_space<vmem>>, vector<1x16x16xf32>
    %14 = arith.addf %12, %13 : vector<1x16x16xf32>
    %c0_21 = arith.constant 0 : index
    %c5_22 = arith.constant 5 : index
    %c0_23 = arith.constant 0 : index
    %15 = vector.load %arg3[%c0_21, %c5_22, %c0_23] : memref<1x27x16xf32, #tpu.memory_space<vmem>>, vector<1x16x16xf32>
    %16 = arith.addf %14, %15 : vector<1x16x16xf32>
    %c0_24 = arith.constant 0 : index
    %c6 = arith.constant 6 : index
    %c0_25 = arith.constant 0 : index
    %17 = vector.load %arg3[%c0_24, %c6, %c0_25] : memref<1x27x16xf32, #tpu.memory_space<vmem>>, vector<1x16x16xf32>
    %18 = arith.addf %16, %17 : vector<1x16x16xf32>
    %c0_26 = arith.constant 0 : index
    %c7 = arith.constant 7 : index
    %c0_27 = arith.constant 0 : index
    %19 = vector.load %arg3[%c0_26, %c7, %c0_27] : memref<1x27x16xf32, #tpu.memory_space<vmem>>, vector<1x16x16xf32>
    %20 = arith.addf %18, %19 : vector<1x16x16xf32>
    %c0_28 = arith.constant 0 : index
    %c8 = arith.constant 8 : index
    %c0_29 = arith.constant 0 : index
    %21 = vector.load %arg3[%c0_28, %c8, %c0_29] : memref<1x27x16xf32, #tpu.memory_space<vmem>>, vector<1x16x16xf32>
    %22 = arith.addf %20, %21 : vector<1x16x16xf32>
    %c0_30 = arith.constant 0 : index
    %c9 = arith.constant 9 : index
    %c0_31 = arith.constant 0 : index
    %23 = vector.load %arg3[%c0_30, %c9, %c0_31] : memref<1x27x16xf32, #tpu.memory_space<vmem>>, vector<1x16x16xf32>
    %24 = arith.addf %22, %23 : vector<1x16x16xf32>
    %c0_32 = arith.constant 0 : index
    %c10 = arith.constant 10 : index
    %c0_33 = arith.constant 0 : index
    %25 = vector.load %arg3[%c0_32, %c10, %c0_33] : memref<1x27x16xf32, #tpu.memory_space<vmem>>, vector<1x16x16xf32>
    %26 = arith.addf %24, %25 : vector<1x16x16xf32>
    %c0_34 = arith.constant 0 : index
    %c11 = arith.constant 11 : index
    %c0_35 = arith.constant 0 : index
    %27 = vector.load %arg3[%c0_34, %c11, %c0_35] : memref<1x27x16xf32, #tpu.memory_space<vmem>>, vector<1x16x16xf32>
    %28 = arith.addf %26, %27 : vector<1x16x16xf32>
    %cst_36 = arith.constant 0.0833333358 : f32
    %29 = vector.broadcast %cst_36 : f32 to vector<1x16x16xf32>
    %30 = arith.mulf %28, %29 : vector<1x16x16xf32>
    %c0_37 = arith.constant 0 : index
    %c0_38 = arith.constant 0 : index
    %c0_39 = arith.constant 0 : index
    %31 = vector.load %arg2[%c0_37, %c0_38, %c0_39] : memref<1x16x16xf32, #tpu.memory_space<vmem>>, vector<1x16x16xf32>
    tpu.vector_store %arg2[%c0_37, %c0_38, %c0_39], %30 {strides = array<i32>} : memref<1x16x16xf32, #tpu.memory_space<vmem>>, vector<1x16x16xf32>,
    return
  }
  func.func @transform_0(%arg0: i32) -> (i32, i32, i32) {
    %c0_i32 = arith.constant 0 : i32
    %c0_i32_0 = arith.constant 0 : i32
    %c0_i32_1 = arith.constant 0 : i32
    return %c0_i32, %c0_i32_0, %arg0 : i32, i32, i32
  }
  func.func @transform_1(%arg0: i32) -> (i32, i32, i32) {
    %c0_i32 = arith.constant 0 : i32
    %c0_i32_0 = arith.constant 0 : i32
    %c0_i32_1 = arith.constant 0 : i32
    return %c0_i32, %c0_i32_0, %arg0 : i32, i32, i32
  }
}

</mosaic_0001>

<llo_original>
// kernel: series_decomp.1
$region0: #{series_decomp.1}
  #allocation0 [shape = 'u32[]', space=smem, size = 0x4, offset = 0x4, fixed_abs, tag = 'smem constant byte address 0x4 - core index']
  #allocation1 [shape = 'u32[144,128]{1,0:T(1,128)}', space=vmem, size = 0x12000, scoped, tag = 'internal scratch']
  #allocation2 [shape = 'f32[1,27,16]{2,1,0:T(8,128)}', space=vmem, size = 0x4000, scoped, tag = 'scratch operand']
  %s0 = inlined_call_operand.vmem [shape: f32[1,16,16], index: 0, kind: input, shape index: {}]
  %s1 = inlined_call_operand.vmem [shape: f32[1,16,16], index: 1, kind: output, shape index: {}]
  %s2 = sld [smem:[#allocation0]]
  $region14: #{series_decomp.1} parent=0
    _
  %s4 = ssub.s32 1, %s2
  %s5 = scalar_select 0, %s4, %s2
  // Predicated region
  $region2: #{series_decomp.1} parent=0 // pred_check
    _
  $region3: #{series_decomp.1} parent=0 // pred_check_branch
    %7 = sbr.rel (0) target = $region5
  $region4: #{series_decomp.1} parent=0 // pred_region
    _
  $region5: #{series_decomp.1} parent=0 // pred_fallthru
    _
  %vm8 = vcmask 126976
  %9 = vst.msk [vmem:[#allocation2] sm:$0x1f] %vm8, 0.0
  %vm10 = vcmask 128000
  %11 = vst.msk [vmem:[#allocation2 + $0x15] sm:$0x3f] %vm10, 0.0
  %v12 = vld [vmem:[%s0] sm:$0xff]
  %v13 = vld [vmem:[%s0 + $0x8] sm:$0xff]
  %vm14 = vcmask 130048
  %15 = vst.msk [vmem:[#allocation2 + $0x5] sm:$0xff] %vm14, %v12
  %16 = vst.msk [vmem:[#allocation2 + $0xd] sm:$0xff] %vm14, %v13
  %v17 = vld [vmem:[#allocation2] sm:$0xff]
  %v18 = vld [vmem:[#allocation2 + $0x8] sm:$0xff]
  %v19 = vld [vmem:[#allocation2 + $0x1] sm:$0xff]
  %v20 = vld [vmem:[#allocation2 + $0x9] sm:$0xff]
  %v21 = vadd.f32 %v17, %v19
  %v22 = vadd.f32 %v18, %v20
  %v23 = vld [vmem:[#allocation2 + $0x2] sm:$0xff]
  %v24 = vld [vmem:[#allocation2 + $0xa] sm:$0xff]
  %v25 = vadd.f32 %v21, %v23
  %v26 = vadd.f32 %v22, %v24
  %v27 = vld [vmem:[#allocation2 + $0x3] sm:$0xff]
  %v28 = vld [vmem:[#allocation2 + $0xb] sm:$0xff]
  %v29 = vadd.f32 %v25, %v27
  %v30 = vadd.f32 %v26, %v28
  %v31 = vld [vmem:[#allocation2 + $0x4] sm:$0xff]
  %v32 = vld [vmem:[#allocation2 + $0xc] sm:$0xff]
  %v33 = vadd.f32 %v29, %v31
  %v34 = vadd.f32 %v30, %v32
  %v35 = vld [vmem:[#allocation2 + $0x5] sm:$0xff]
  %v36 = vld [vmem:[#allocation2 + $0xd] sm:$0xff]
  %v37 = vadd.f32 %v33, %v35
  %v38 = vadd.f32 %v34, %v36
  %v39 = vld [vmem:[#allocation2 + $0x6] sm:$0xff]
  %v40 = vld [vmem:[#allocation2 + $0xe] sm:$0xff]
  %v41 = vadd.f32 %v37, %v39
  %v42 = vadd.f32 %v38, %v40
  %v43 = vld [vmem:[#allocation2 + $0x7] sm:$0xff]
  %v44 = vld [vmem:[#allocation2 + $0xf] sm:$0xff]
  %v45 = vadd.f32 %v41, %v43
  %v46 = vadd.f32 %v42, %v44
  %v47 = vld [vmem:[#allocation2 + $0x10] sm:$0xff]
  %v48 = vadd.f32 %v45, %v18
  %v49 = vadd.f32 %v46, %v47
  %v50 = vld [vmem:[#allocation2 + $0x11] sm:$0xff]
  %v51 = vadd.f32 %v48, %v20
  %v52 = vadd.f32 %v49, %v50
  %v53 = vld [vmem:[#allocation2 + $0x12] sm:$0xff]
  %v54 = vadd.f32 %v51, %v24
  %v55 = vadd.f32 %v52, %v53
  %v56 = vld [vmem:[#allocation2 + $0x13] sm:$0xff]
  %v57 = vadd.f32 %v54, %v28
  %v58 = vadd.f32 %v55, %v56
  %v59 = vmul.f32 %v57, 0.083333336
  %v60 = vmul.f32 %v58, 0.083333336
  %61 = vst.msk [vmem:[%s1] sm:$0xff] %vm14, %v59
  %62 = vst.msk [vmem:[%s1 + $0x8] sm:$0xff] %vm14, %v60
  // Predicated region
  $region6: #{series_decomp.1} parent=0 // pred_check
    _
  $region7: #{series_decomp.1} parent=0 // pred_check_branch
    %64 = sbr.rel (0) target = $region9
  $region8: #{series_decomp.1} parent=0 // pred_region
    _
  $region9: #{series_decomp.1} parent=0 // pred_fallthru
    _
  // Predicated region
  $region10: #{series_decomp.1} parent=0 // pred_check
    _
  $region11: #{series_decomp.1} parent=0 // pred_check_branch
    %66 = sbr.rel (0) target = $region13
  $region12: #{series_decomp.1} parent=0 // pred_region
    _
  $region13: #{series_decomp.1} parent=0 // pred_fallthru
    _

</llo_original>
